<compile_context>
chip_gen: v6e
topology: v6e:2x2x1
jax: 0.10.0
libtpu: 0.0.40
codegen_flags: <defaults>
</compile_context>

<pallas_src>
import functools

import jax
import jax.numpy as jnp
from jax.experimental import pallas as pl
from jax.experimental.pallas import tpu as pltpu


def _se_kernel(x_ref, w1t_ref, w2t_ref, o_ref, *, inv_hw):
    # x_ref  : (BT, c, hw)   BT samples' activations (input dtype)
    # w1t_ref: (c, c_red)    fc1 weight, pre-transposed, f32
    # w2t_ref: (c_red, c)    fc2 weight, pre-transposed, f32
    # o_ref  : (BT, c, hw)
    xb = x_ref[...]                                                  # (BT, c, hw)

    # ---- squeeze: global average pool over spatial (f32 accumulate,
    #      no materialized f32 copy of the slab) ----
    pooled = jnp.sum(xb, axis=-1, dtype=jnp.float32) * inv_hw        # (BT, c)

    # ---- excitation: fc1 -> relu -> fc2 -> hsigmoid on the MXU (f32 acc) ----
    y1 = jnp.dot(pooled, w1t_ref[...],
                 preferred_element_type=jnp.float32)                 # (BT, c_red)
    y1 = jnp.maximum(y1, 0.0)                                        # ReLU
    y2 = jnp.dot(y1, w2t_ref[...],
                 preferred_element_type=jnp.float32)                 # (BT, c)
    gate = jnp.clip(y2 + 3.0, 0.0, 6.0) * (1.0 / 6.0)                # hsigmoid

    # ---- scale: channel-wise multiply, stays in the input dtype ----
    o_ref[...] = (xb * gate[:, :, None].astype(xb.dtype)).astype(o_ref.dtype)


def _pick_block_batch(b, per_sample_bytes, target_bytes=2 << 20):
    """Largest divisor of b whose x block stays under ~target_bytes, while
    keeping the grid length >= 2 (when b allows) so v7x megacore splits work."""
    divisors = [d for d in range(1, b + 1) if b % d == 0]
    fits = [d for d in divisors if d * per_sample_bytes <= target_bytes]
    bt = max(fits) if fits else 1
    if b >= 2:
        while b // bt < 2:
            smaller = [d for d in divisors if d < bt]
            if not smaller:
                break
            bt = max(smaller)
    return bt


def se_module(x, w1, w2):
    """SEModule forward.

    x : (b, c, h, w) NCHW activation.
    w1: (c_red, c)  fc1 weight (nn.Linear layout, no bias).
    w2: (c, c_red)  fc2 weight (nn.Linear layout, no bias).
    """
    b, c, h, w = x.shape
    hw = h * w
    c_red = w1.shape[0]
    assert w1.shape == (c_red, c), w1.shape
    assert w2.shape == (c, c_red), w2.shape

    # Free layout plumbing: merge the contiguous spatial dims (no HBM copy).
    x3 = x.reshape(b, c, hw)

    # Tiny one-time weight transposes + casts, hoisted out of the grid loop.
    w1t = w1.T.astype(jnp.float32)   # (c, c_red)
    w2t = w2.T.astype(jnp.float32)   # (c_red, c)

    itemsize = jnp.dtype(x.dtype).itemsize
    per_sample = c * hw * itemsize
    bt = _pick_block_batch(b, per_sample)
    grid = (b // bt,)

    # VMEM budget from the actual footprint: double-buffered in+out x blocks
    # plus (double-buffered) weights plus slack; capped for v7x's 64 MiB VMEM.
    block_bytes = bt * per_sample
    weight_bytes = (w1t.size + w2t.size) * 4
    needed = 4 * block_bytes + 2 * weight_bytes + (2 << 20)
    vmem_limit = int(min(max(needed, 16 << 20), 32 << 20))

    kernel = functools.partial(_se_kernel, inv_hw=float(1.0 / hw))

    out3 = pl.pallas_call(
        kernel,
        out_shape=jax.ShapeDtypeStruct((b, c, hw), x.dtype),
        grid_spec=pltpu.PrefetchScalarGridSpec(
            num_scalar_prefetch=0,
            grid=grid,
            in_specs=[
                pl.BlockSpec((bt, c, hw), lambda i: (i, 0, 0)),   # x slab (BT samples)
                pl.BlockSpec((c, c_red), lambda i: (0, 0)),       # fc1 weight (T, f32)
                pl.BlockSpec((c_red, c), lambda i: (0, 0)),       # fc2 weight (T, f32)
            ],
            out_specs=pl.BlockSpec((bt, c, hw), lambda i: (i, 0, 0)),
        ),
        compiler_params=pltpu.CompilerParams(
            dimension_semantics=("parallel",),    # batch blocks split across TCs (v7x)
            vmem_limit_bytes=vmem_limit,
        ),
    )(x3, w1t, w2t)

    return out3.reshape(b, c, h, w)


if __name__ == "__main__":
    key = jax.random.PRNGKey(0)
    k1, k2, k3 = jax.random.split(key, 3)

    # Small NCHW activation consistent with the module; reduction=4.
    b, c, h, w = 2, 8, 16, 16
    reduction = 4
    c_red = max(c // reduction, 1)

    x = jax.random.normal(k1, (b, c, h, w), dtype=jnp.float32) * 2.0
    w1 = jax.random.normal(k2, (c_red, c), dtype=jnp.float32) * 0.5   # fc1 weight
    w2 = jax.random.normal(k3, (c, c_red), dtype=jnp.float32) * 0.5   # fc2 weight

    out = jax.block_until_ready(se_module(x, w1, w2))

    # Pure-JAX reference of the PyTorch SEModule forward.
    pooled = jnp.mean(x, axis=(2, 3))                      # (b, c)
    y1 = jnp.maximum(pooled @ w1.T, 0.0)                   # fc1 + ReLU
    y2 = y1 @ w2.T                                         # fc2
    gate = jnp.clip(y2 + 3.0, 0.0, 6.0) / 6.0              # hsigmoid
    ref = x * gate[:, :, None, None]

    assert out.shape == x.shape and out.dtype == x.dtype
    assert jnp.allclose(out, ref, atol=1e-5, rtol=1e-5), (
        f"max err {jnp.max(jnp.abs(out - ref))}"
    )
    print("KERNEL_OK")
</pallas_src>

<mosaic_0001>
module attributes {stable_mosaic.version = 11 : i64} {
  func.func @_se_kernel(%arg0: i32, %arg1: memref<1x8x256xf32, #tpu.memory_space<vmem>>, %arg2: memref<8x2xf32, #tpu.memory_space<vmem>>, %arg3: memref<2x8xf32, #tpu.memory_space<vmem>>, %arg4: memref<1x8x256xf32, #tpu.memory_space<vmem>>) attributes {dimension_semantics = [#tpu.dimension_semantics<parallel>], iteration_bounds = array<i64: 2>, scalar_prefetch = 0 : i64, scratch_operands = 0 : i64, tpu.core_type = #tpu.core_type<tc>, window_params = [{transform_indices = @transform_0, window_bounds = array<i64: 1, 8, 256>}, {pipeline_mode = #tpu.pipeline_mode<synchronous>, transform_indices = @transform_1, window_bounds = array<i64: 8, 2>}, {pipeline_mode = #tpu.pipeline_mode<synchronous>, transform_indices = @transform_2, window_bounds = array<i64: 2, 8>}, {transform_indices = @transform_3, window_bounds = array<i64: 1, 8, 256>}]} {
    %c0 = arith.constant 0 : index
    %c0_0 = arith.constant 0 : index
    %c0_1 = arith.constant 0 : index
    %0 = vector.load %arg1[%c0, %c0_0, %c0_1] : memref<1x8x256xf32, #tpu.memory_space<vmem>>, vector<1x8x256xf32>
    %cst = arith.constant dense<0.000000e+00> : vector<1x8xf32>
    %1 = vector.multi_reduction <add>, %0, %cst [2] : vector<1x8x256xf32> to vector<1x8xf32>
    %cst_2 = arith.constant 3.906250e-03 : f32
    %2 = vector.broadcast %cst_2 : f32 to vector<1x8xf32>
    %3 = arith.mulf %1, %2 : vector<1x8xf32>
    %c0_3 = arith.constant 0 : index
    %c0_4 = arith.constant 0 : index
    %4 = vector.load %arg2[%c0_3, %c0_4] : memref<8x2xf32, #tpu.memory_space<vmem>>, vector<8x2xf32>
    %cst_5 = arith.constant dense<0.000000e+00> : vector<1x2xf32>
    %5 = tpu.matmul %3, %4, %cst_5 {dimension_numbers = #tpu.dot_dimension_numbers<[1], [0], [0], [1], [0, 0, 1, 1], [], []>} : vector<1x8xf32>, vector<8x2xf32>, vector<1x2xf32> -> vector<1x2xf32>
    %cst_6 = arith.constant 0.000000e+00 : f32
    %6 = vector.broadcast %cst_6 : f32 to vector<1x2xf32>
    %7 = arith.maximumf %5, %6 : vector<1x2xf32>
    %c0_7 = arith.constant 0 : index
    %c0_8 = arith.constant 0 : index
    %8 = vector.load %arg3[%c0_7, %c0_8] : memref<2x8xf32, #tpu.memory_space<vmem>>, vector<2x8xf32>
    %cst_9 = arith.constant dense<0.000000e+00> : vector<1x8xf32>
    %9 = tpu.matmul %7, %8, %cst_9 {dimension_numbers = #tpu.dot_dimension_numbers<[1], [0], [0], [1], [0, 0, 1, 1], [], []>} : vector<1x2xf32>, vector<2x8xf32>, vector<1x8xf32> -> vector<1x8xf32>
    %cst_10 = arith.constant 3.000000e+00 : f32
    %10 = vector.broadcast %cst_10 : f32 to vector<1x8xf32>
    %11 = arith.addf %9, %10 : vector<1x8xf32>
    %cst_11 = arith.constant 0.000000e+00 : f32
    %cst_12 = arith.constant 6.000000e+00 : f32
    %12 = vector.broadcast %cst_11 : f32 to vector<1x8xf32>
    %13 = arith.maximumf %12, %11 : vector<1x8xf32>
    %14 = vector.broadcast %cst_12 : f32 to vector<1x8xf32>
    %15 = arith.minimumf %14, %13 : vector<1x8xf32>
    %cst_13 = arith.constant 0.166666672 : f32
    %16 = vector.broadcast %cst_13 : f32 to vector<1x8xf32>
    %17 = arith.mulf %15, %16 : vector<1x8xf32>
    %18 = vector.shape_cast %17 : vector<1x8xf32> to vector<1x8x1xf32>
    %19 = vector.broadcast %18 : vector<1x8x1xf32> to vector<1x8x256xf32>
    %20 = arith.mulf %0, %19 : vector<1x8x256xf32>
    %c0_14 = arith.constant 0 : index
    %c0_15 = arith.constant 0 : index
    %c0_16 = arith.constant 0 : index
    %21 = vector.load %arg4[%c0_14, %c0_15, %c0_16] : memref<1x8x256xf32, #tpu.memory_space<vmem>>, vector<1x8x256xf32>
    tpu.vector_store %arg4[%c0_14, %c0_15, %c0_16], %20 {strides = array<i32>} : memref<1x8x256xf32, #tpu.memory_space<vmem>>, vector<1x8x256xf32>,
    return
  }
  func.func @transform_0(%arg0: i32) -> (i32, i32, i32) {
    %c0_i32 = arith.constant 0 : i32
    %c0_i32_0 = arith.constant 0 : i32
    %c0_i32_1 = arith.constant 0 : i32
    return %arg0, %c0_i32, %c0_i32_0 : i32, i32, i32
  }
  func.func @transform_1(%arg0: i32) -> (i32, i32) {
    %c0_i32 = arith.constant 0 : i32
    %c0_i32_0 = arith.constant 0 : i32
    %c0_i32_1 = arith.constant 0 : i32
    return %c0_i32, %c0_i32_0 : i32, i32
  }
  func.func @transform_2(%arg0: i32) -> (i32, i32) {
    %c0_i32 = arith.constant 0 : i32
    %c0_i32_0 = arith.constant 0 : i32
    %c0_i32_1 = arith.constant 0 : i32
    return %c0_i32, %c0_i32_0 : i32, i32
  }
  func.func @transform_3(%arg0: i32) -> (i32, i32, i32) {
    %c0_i32 = arith.constant 0 : i32
    %c0_i32_0 = arith.constant 0 : i32
    %c0_i32_1 = arith.constant 0 : i32
    return %arg0, %c0_i32, %c0_i32_0 : i32, i32, i32
  }
}

</mosaic_0001>

<llo_original>
// kernel: tpu_custom_call.1
$region0: #{tpu_custom_call.1}
  #allocation0 [shape = 'u32[]', space=smem, size = 0x4, offset = 0x4, fixed_abs, tag = 'smem constant byte address 0x4 - core index']
  #allocation1 [shape = 'u32[144,128]{1,0:T(1,128)}', space=vmem, size = 0x12000, scoped, tag = 'internal scratch']
  %s0 = inlined_call_operand.hbm [shape: f32[2,8,256], index: 0, kind: input, shape index: {}]
  %s1 = inlined_call_operand.vmem [shape: f32[8,2], index: 1, kind: input, shape index: {}]
  %s2 = inlined_call_operand.vmem [shape: f32[2,8], index: 2, kind: input, shape index: {}]
  %s3 = inlined_call_operand.hbm [shape: f32[2,8,256], index: 3, kind: output, shape index: {}]
  %s4 = sld [smem:[#allocation0]]
  $region49: #{tpu_custom_call.1} parent=0
    _
  %s6 = ssub.s32 1, %s4
  %s7 = scalar_select 0, %s6, %s4
  $region1: #{tpu_custom_call.1} parent=0
    #allocation2 [shape = 'u8[16384]{0}', space=vmem, size = 0x4000, scoped, tag = 'input window, operand 0']
    #allocation3 [shape = 's32[2]{0}', space=sflag, size = 0x8, scoped, tag = 'scoped memory for tpu_custom_call.1']
    #allocation4 [shape = 's32[2]{0}', space=sflag, size = 0x8, scoped, tag = 'scoped memory for tpu_custom_call.1']
    #allocation5 [shape = 'u8[16384]{0}', space=vmem, size = 0x4000, scoped, tag = 'output window, operand 0']
    %8 = vsyncpa [#allocation3], 0
    %s9 = scalar_lea.sflag [#allocation3], 1
    %10 = vsyncpa %s9, 0
    %11 = vsyncpa [#allocation4], 0
    %s12 = scalar_lea.sflag [#allocation4], 1
    %13 = vsyncpa %s12, 0
    loop: start=0, step=1, limit=4
    $region2: #{tpu_custom_call.1} parent=1 // loop_pre_header
      _
    $region3: #{tpu_custom_call.1} parent=1 // loop_header
      %s15 = sphi 0, %s19
      %p16 = scmp.ge.s32.totalorder %s15, 4
      %s25 = sphi 0, %s27
      %s28 = sphi 0, %s25
      %s29 = sphi 0, %s28
      %s45 = sphi 0, %s29
      %s49 = sphi 0, %s49
      %s51 = sphi 0, %s49
      %s52 = sphi 0, %s51
      %s66 = sphi 0, %s52
      %s70 = sphi 0, %s70
      %s72 = sphi 0, %s70
      %s73 = sphi 0, %s72
      %s87 = sphi 0, %s73
      %s93 = sphi 0, %s95
      %s96 = sphi 0, %s93
      %s97 = sphi 0, %s96
      %s113 = sphi 0, %s97
    $region4: #{tpu_custom_call.1} parent=1 // loop_header_branch
      %18 = sbr.rel (%p16) target = $region8
    $region5: #{tpu_custom_call.1} parent=1 // loop_body
      %s20 = ssub.s32 %s15, 1
      %s21 = ssub.s32 %s15, 2
      %s22 = sadd.s32 %s15, 1
      %s23 = ssub.s32 %s15, %s22
      %p24 = scmp.eq.s32.totalorder %s23, 0
      %s26 = sadd.s32 %s25, 1
      %s27 = scalar_select %p24, %s25, %s26
      %p30 = pneg %p24
      %p31 = scmp.eq.s32.totalorder %s15, 1
      %p32 = por %p30, %p31
      %p33 = scmp.ne.s32.totalorder %s25, %s28
      %p34 = scmp.eq.s32.totalorder %s15, 0
      %p35 = por %p33, %p34
      %p36 = scmp.ne.s32.totalorder %s25, %s28
      %p37 = scmp.eq.s32.totalorder %s20, 1
      %p38 = por %p36, %p37
      %p39 = scmp.ne.s32.totalorder %s28, %s29
      %p40 = scmp.eq.s32.totalorder %s20, 0
      %p41 = por %p39, %p40
      %p42 = scmp.ne.s32.totalorder %s28, %s29
      %p43 = scmp.eq.s32.totalorder %s21, 1
      %p44 = por %p42, %p43
      %p46 = scmp.ne.s32.totalorder %s29, %s45
      %p47 = scmp.eq.s32.totalorder %s21, 0
      %p48 = por %p46, %p47
      %s50 = sadd.s32 %s49, 1
      %p53 = scmp.eq.s32.totalorder %s15, 1
      %p54 = scmp.ne.s32.totalorder %s49, %s51
      %p55 = scmp.eq.s32.totalorder %s15, 0
      %p56 = por %p54, %p55
      %p57 = scmp.ne.s32.totalorder %s49, %s51
      %p58 = scmp.eq.s32.totalorder %s20, 1
      %p59 = por %p57, %p58
      %p60 = scmp.ne.s32.totalorder %s51, %s52
      %p61 = scmp.eq.s32.totalorder %s20, 0
      %p62 = por %p60, %p61
      %p63 = scmp.ne.s32.totalorder %s51, %s52
      %p64 = scmp.eq.s32.totalorder %s21, 1
      %p65 = por %p63, %p64
      %p67 = scmp.ne.s32.totalorder %s52, %s66
      %p68 = scmp.eq.s32.totalorder %s21, 0
      %p69 = por %p67, %p68
      %s71 = sadd.s32 %s70, 1
      %p74 = scmp.eq.s32.totalorder %s15, 1
      %p75 = scmp.ne.s32.totalorder %s70, %s72
      %p76 = scmp.eq.s32.totalorder %s15, 0
      %p77 = por %p75, %p76
      %p78 = scmp.ne.s32.totalorder %s70, %s72
      %p79 = scmp.eq.s32.totalorder %s20, 1
      %p80 = por %p78, %p79
      %p81 = scmp.ne.s32.totalorder %s72, %s73
      %p82 = scmp.eq.s32.totalorder %s20, 0
      %p83 = por %p81, %p82
      %p84 = scmp.ne.s32.totalorder %s72, %s73
      %p85 = scmp.eq.s32.totalorder %s21, 1
      %p86 = por %p84, %p85
      %p88 = scmp.ne.s32.totalorder %s73, %s87
      %p89 = scmp.eq.s32.totalorder %s21, 0
      %p90 = por %p88, %p89
      %s91 = ssub.s32 %s15, %s22
      %p92 = scmp.eq.s32.totalorder %s91, 0
      %s94 = sadd.s32 %s93, 1
      %s95 = scalar_select %p92, %s93, %s94
      %p98 = pneg %p92
      %p99 = scmp.eq.s32.totalorder %s15, 1
      %p100 = por %p98, %p99
      %p101 = scmp.ne.s32.totalorder %s93, %s96
      %p102 = scmp.eq.s32.totalorder %s15, 0
      %p103 = por %p101, %p102
      %p104 = scmp.ne.s32.totalorder %s93, %s96
      %p105 = scmp.eq.s32.totalorder %s20, 1
      %p106 = por %p104, %p105
      %p107 = scmp.ne.s32.totalorder %s96, %s97
      %p108 = scmp.eq.s32.totalorder %s20, 0
      %p109 = por %p107, %p108
      %p110 = scmp.ne.s32.totalorder %s96, %s97
      %p111 = scmp.eq.s32.totalorder %s21, 1
      %p112 = por %p110, %p111
      %p114 = scmp.ne.s32.totalorder %s97, %s113
      %p115 = scmp.eq.s32.totalorder %s21, 0
      %p116 = por %p114, %p115
      %p117 = scmp.le.s32.totalorder 1, %s15
      %p118 = scmp.lt.s32.totalorder %s15, 3
      %p119 = pnand %p117, %p118
      %p120 = pneg %p119
      // Predicated region
      $region9: #{tpu_custom_call.1} parent=5 // pred_check
        _
      $region10: #{tpu_custom_call.1} parent=5 // pred_check_branch
        %122 = sbr.rel (%p119) target = $region12
      $region11: #{tpu_custom_call.1} parent=5 // pred_region
        %s123 = ssub.s32 %s15, 1
        // Predicated region
        $region13: #{tpu_custom_call.1} parent=11 // pred_check
          %p124 = pneg %p62
        $region14: #{tpu_custom_call.1} parent=11 // pred_check_branch
          %126 = sbr.rel (%p124) target = $region16
        $region15: #{tpu_custom_call.1} parent=11 // pred_region
          _
        $region16: #{tpu_custom_call.1} parent=11 // pred_fallthru
          _
        // Predicated region
        $region17: #{tpu_custom_call.1} parent=11 // pred_check
          %p127 = pneg %p83
        $region18: #{tpu_custom_call.1} parent=11 // pred_check_branch
          %129 = sbr.rel (%p127) target = $region20
        $region19: #{tpu_custom_call.1} parent=11 // pred_region
          _
        $region20: #{tpu_custom_call.1} parent=11 // pred_fallthru
          _
      $region12: #{tpu_custom_call.1} parent=5 // pred_fallthru
        _
      %p130 = scmp.lt.s32.totalorder %s15, 2
      // Predicated region
      $region21: #{tpu_custom_call.1} parent=5 // pred_check
        %p131 = pneg %p130
      $region22: #{tpu_custom_call.1} parent=5 // pred_check_branch
        %133 = sbr.rel (%p131) target = $region24
      $region23: #{tpu_custom_call.1} parent=5 // pred_region
        // Predicated region
        $region25: #{tpu_custom_call.1} parent=23 // pred_check
          %p134 = pneg %p35
        $region26: #{tpu_custom_call.1} parent=23 // pred_check_branch
          %136 = sbr.rel (%p134) target = $region28
        $region27: #{tpu_custom_call.1} parent=23 // pred_region
          %s137 = sand.u32 %s25, 1
          %s138 = scalar_lea.sflag [#allocation3], %s137
          %s139 = sand.u32 %s25, 1
          %s140 = smul.addr %s139, 16
          %s141 = scalar_lea.vmem [#allocation2], %s140
          %s143 = ssub.s32 256, 256
          %144 = vsyncadd %s138, %s143
          %s145 = smul.addr %s15, 2
          %s146 = smul.addr %s145, 128
          %s147 = scalar_lea.hbm %s0, %s146
          %s149 = sshll.u32 %s141, 4
          %s150 = int_to_ptr.vmem [resolvable:$true] %s149
          %152 = dma.hbm_to_vmem [thread:$0]  %s147, 256, %s150, %s138
        $region28: #{tpu_custom_call.1} parent=23 // pred_fallthru
          _
      $region24: #{tpu_custom_call.1} parent=5 // pred_fallthru
        _
      %p153 = scmp.le.s32.totalorder 1, %s15
      %p154 = scmp.lt.s32.totalorder %s15, 3
      %p155 = pnand %p153, %p154
      %p156 = pneg %p155
      // Predicated region
      $region29: #{tpu_custom_call.1} parent=5 // pred_check
        _
      $region30: #{tpu_custom_call.1} parent=5 // pred_check_branch
        %158 = sbr.rel (%p155) target = $region32
      $region31: #{tpu_custom_call.1} parent=5 // pred_region
        %s159 = ssub.s32 %s15, 1
        %s160 = sand.u32 %s28, 1
        %s161 = scalar_lea.sflag [#allocation3], %s160
        %s162 = sand.u32 %s28, 1
        %s163 = smul.addr %s162, 16
        %s164 = scalar_lea.vmem [#allocation2], %s163
        // Predicated region
        $region33: #{tpu_custom_call.1} parent=31 // pred_check
          %p165 = pneg %p41
        $region34: #{tpu_custom_call.1} parent=31 // pred_check_branch
          %167 = sbr.rel (%p165) target = $region36
        $region35: #{tpu_custom_call.1} parent=31 // pred_region
          %168 = dma.done %s161, 256
        $region36: #{tpu_custom_call.1} parent=31 // pred_fallthru
          _
        %s169 = sand.u32 %s28, 1
        %s170 = scalar_lea.sflag [#allocation3], %s169
        %s171 = sand.u32 %s28, 1
        %s172 = smul.addr %s171, 16
        %s173 = scalar_lea.vmem [#allocation2], %s172
        %p174 = pneg %p41
        %p175 = pneg %p38
        %p176 = pneg %p62
        %p177 = pneg %p59
        %p178 = pneg %p83
        %p179 = pneg %p80
        %p180 = pneg %p109
        %p181 = pneg %p106
        %s182 = sand.u32 %s96, 1
        %s183 = scalar_lea.sflag [#allocation4], %s182
        %s184 = sand.u32 %s96, 1
        %s185 = smul.addr %s184, 16
        %s186 = scalar_lea.vmem [#allocation5], %s185
        %v187 = vld [vmem:[%s164] sm:$0xff]
        %v188 = vld [vmem:[%s164 + $0x8] sm:$0xff]
        %v189 = vadd.f32 %v187, %v188
        %190 = vadd.xlane.f32.xlu0 %v189
        %v191 = vpop.xlane.xlu0 %190
        %v192 = vmul.f32 %v191, 0.00390625
        %v193 = vld [vmem:[%s1] sm:$0xff]
        %v195 = vlaneseq
        %v196 = vand.u32 %v195, 127
        %v197 = vlaneseq
        %v198 = vshrl.u32 %v197, 7
        %v199 = vsub.s32 %v196, %v198
        %v200 = vrot.slane %v192, %v199
        %vm201 = vcmask 64512
        %v202 = vsel %vm201, %v200, 0
        %204 = vmatprep.subr.mxu0 0.0
        %205 = vmatpush1.msra.mxu0 0.0
        %206 = vmatprep.subr.mxu0 0.0
        %207 = vmatpush1.msra.mxu0 0.0
        %208 = vmatprep.subr.mxu0 0.0
        %209 = vmatpush1.msra.mxu0 0.0
        %210 = vmatprep.subr.mxu0 0.0
        %211 = vmatpush1.msra.mxu0 0.0
        %212 = vmatprep.subr.mxu0 0.0
        %213 = vmatpush1.msra.mxu0 0.0
        %214 = vmatprep.subr.mxu0 0.0
        %215 = vmatpush1.msra.mxu0 0.0
        %216 = vmatprep.subr.mxu0 0.0
        %217 = vmatpush1.msra.mxu0 0.0
        %218 = vmatprep.subr.mxu0 0.0
        %219 = vmatpush1.msra.mxu0 0.0
        %220 = vmatprep.subr.mxu0 0.0
        %221 = vmatpush1.msra.mxu0 0.0
        %222 = vmatprep.subr.mxu0 0.0
        %223 = vmatpush1.msra.mxu0 0.0
        %224 = vmatprep.subr.mxu0 0.0
        %225 = vmatpush1.msra.mxu0 0.0
        %226 = vmatprep.subr.mxu0 0.0
        %227 = vmatpush1.msra.mxu0 0.0
        %228 = vmatprep.subr.mxu0 0.0
        %229 = vmatpush1.msra.mxu0 0.0
        %230 = vmatprep.subr.mxu0 0.0
        %231 = vmatpush1.msra.mxu0 0.0
        %232 = vmatprep.subr.mxu0 0.0
        %233 = vmatpush1.msra.mxu0 0.0
        %234 = vmatprep.subr.mxu0 0.0
        %235 = vmatpush1.msra.mxu0 %v193
        %236 = vmatprep.subr.mxu0 0.0
        %237 = vmatpush2.msra.mxu0 0.0
        %238 = vmatprep.subr.mxu0 0.0
        %239 = vmatpush2.msra.mxu0 0.0
        %240 = vmatprep.subr.mxu0 0.0
        %241 = vmatpush2.msra.mxu0 0.0
        %242 = vmatprep.subr.mxu0 0.0
        %243 = vmatpush2.msra.mxu0 0.0
        %244 = vmatprep.subr.mxu0 0.0
        %245 = vmatpush2.msra.mxu0 0.0
        %246 = vmatprep.subr.mxu0 0.0
        %247 = vmatpush2.msra.mxu0 0.0
        %248 = vmatprep.subr.mxu0 0.0
        %249 = vmatpush2.msra.mxu0 0.0
        %250 = vmatprep.subr.mxu0 0.0
        %251 = vmatpush2.msra.mxu0 0.0
        %252 = vmatprep.subr.mxu0 0.0
        %253 = vmatpush2.msra.mxu0 0.0
        %254 = vmatprep.subr.mxu0 0.0
        %255 = vmatpush2.msra.mxu0 0.0
        %256 = vmatprep.subr.mxu0 0.0
        %257 = vmatpush2.msra.mxu0 0.0
        %258 = vmatprep.subr.mxu0 0.0
        %259 = vmatpush2.msra.mxu0 0.0
        %260 = vmatprep.subr.mxu0 0.0
        %261 = vmatpush2.msra.mxu0 0.0
        %262 = vmatprep.subr.mxu0 0.0
        %263 = vmatpush2.msra.mxu0 0.0
        %264 = vmatprep.subr.mxu0 0.0
        %265 = vmatpush2.msra.mxu0 0.0
        %266 = vmatprep.subr.mxu0 0.0
        %267 = vmatpush2.msra.mxu0 0.0
        %268 = vmatprep.mubr.f32.mxu0 0.0
        %269 = vmatmul.mubr.f32.gmra.mxu0 %v202
        %v270 = vpop.f32.mrf.mxu0
        %v271 = vadd.f32 0.0, %v270
        %v272 = vpop.f32.mrf.mxu0
        %273 = vdwg.mxu0
        %v274 = vmax.f32 %v271, 0.0
        %v275 = vld [vmem:[%s2] sm:$0x3]
        %vm276 = vcmask 15360
        %v278 = vsel %vm276, %v274, 0
        %vm280 = vcmask 1041408
        %v282 = vsel %vm280, %v275, 0
        %284 = vmatprep.subr.mxu0 0.0
        %285 = vmatpush1.msra.mxu0 0.0
        %286 = vmatprep.subr.mxu0 0.0
        %287 = vmatpush1.msra.mxu0 0.0
        %288 = vmatprep.subr.mxu0 0.0
        %289 = vmatpush1.msra.mxu0 0.0
        %290 = vmatprep.subr.mxu0 0.0
        %291 = vmatpush1.msra.mxu0 0.0
        %292 = vmatprep.subr.mxu0 0.0
        %293 = vmatpush1.msra.mxu0 0.0
        %294 = vmatprep.subr.mxu0 0.0
        %295 = vmatpush1.msra.mxu0 0.0
        %296 = vmatprep.subr.mxu0 0.0
        %297 = vmatpush1.msra.mxu0 0.0
        %298 = vmatprep.subr.mxu0 0.0
        %299 = vmatpush1.msra.mxu0 0.0
        %300 = vmatprep.subr.mxu0 0.0
        %301 = vmatpush1.msra.mxu0 0.0
        %302 = vmatprep.subr.mxu0 0.0
        %303 = vmatpush1.msra.mxu0 0.0
        %304 = vmatprep.subr.mxu0 0.0
        %305 = vmatpush1.msra.mxu0 0.0
        %306 = vmatprep.subr.mxu0 0.0
        %307 = vmatpush1.msra.mxu0 0.0
        %308 = vmatprep.subr.mxu0 0.0
        %309 = vmatpush1.msra.mxu0 0.0
        %310 = vmatprep.subr.mxu0 0.0
        %311 = vmatpush1.msra.mxu0 0.0
        %312 = vmatprep.subr.mxu0 0.0
        %313 = vmatpush1.msra.mxu0 0.0
        %314 = vmatprep.subr.mxu0 0.0
        %315 = vmatpush1.msra.mxu0 %v282
        %316 = vmatprep.subr.mxu0 0.0
        %317 = vmatpush2.msra.mxu0 0.0
        %318 = vmatprep.subr.mxu0 0.0
        %319 = vmatpush2.msra.mxu0 0.0
        %320 = vmatprep.subr.mxu0 0.0
        %321 = vmatpush2.msra.mxu0 0.0
        %322 = vmatprep.subr.mxu0 0.0
        %323 = vmatpush2.msra.mxu0 0.0
        %324 = vmatprep.subr.mxu0 0.0
        %325 = vmatpush2.msra.mxu0 0.0
        %326 = vmatprep.subr.mxu0 0.0
        %327 = vmatpush2.msra.mxu0 0.0
        %328 = vmatprep.subr.mxu0 0.0
        %329 = vmatpush2.msra.mxu0 0.0
        %330 = vmatprep.subr.mxu0 0.0
        %331 = vmatpush2.msra.mxu0 0.0
        %332 = vmatprep.subr.mxu0 0.0
        %333 = vmatpush2.msra.mxu0 0.0
        %334 = vmatprep.subr.mxu0 0.0
        %335 = vmatpush2.msra.mxu0 0.0
        %336 = vmatprep.subr.mxu0 0.0
        %337 = vmatpush2.msra.mxu0 0.0
        %338 = vmatprep.subr.mxu0 0.0
        %339 = vmatpush2.msra.mxu0 0.0
        %340 = vmatprep.subr.mxu0 0.0
        %341 = vmatpush2.msra.mxu0 0.0
        %342 = vmatprep.subr.mxu0 0.0
        %343 = vmatpush2.msra.mxu0 0.0
        %344 = vmatprep.subr.mxu0 0.0
        %345 = vmatpush2.msra.mxu0 0.0
        %346 = vmatprep.subr.mxu0 0.0
        %347 = vmatpush2.msra.mxu0 0.0
        %348 = vmatprep.mubr.f32.mxu0 0.0
        %349 = vmatmul.mubr.f32.gmra.mxu0 %v278
        %v350 = vpop.f32.mrf.mxu0
        %v351 = vadd.f32 3.0, %v350
        %v352 = vpop.f32.mrf.mxu0
        %353 = vdwg.mxu0
        %v354 = vmax.f32 %v351, 0.0
        %v355 = vmin.f32 %v354, 6.0
        %v356 = vmul.f32 %v355, 0.16666667
        %v357 = vlaneseq
        %v358 = vshrl.u32 %v357, 7
        %v359 = vsub.s32 0, %v358
        %v360 = vrot.slane %v356, %v359
        %362 = vbcast.lane.b32.xlu0 %v360, 256
        %v363 = vpop.permute.xlu0 %362
        %v364 = vmul.f32 %v187, %v363
        %v365 = vmul.f32 %v188, %v363
        %366 = vst [vmem:[%s186] sm:$0xff] %v364
        %367 = vst [vmem:[%s186 + $0x8] sm:$0xff] %v365
        %s368 = sand.u32 %s96, 1
        %s369 = scalar_lea.sflag [#allocation4], %s368
        %s370 = sand.u32 %s96, 1
        %s371 = smul.addr %s370, 16
        %s372 = scalar_lea.vmem [#allocation5], %s371
        // Predicated region
        $region37: #{tpu_custom_call.1} parent=31 // pred_check
          %p373 = pneg %p106
        $region38: #{tpu_custom_call.1} parent=31 // pred_check_branch
          %375 = sbr.rel (%p373) target = $region40
        $region39: #{tpu_custom_call.1} parent=31 // pred_region
          %s377 = ssub.s32 256, 256
          %378 = vsyncadd %s369, %s377
          %s379 = smul.addr %s20, 2
          %s380 = smul.addr %s379, 128
          %s381 = scalar_lea.hbm %s3, %s380
          %s383 = sshll.u32 %s372, 4
          %s384 = int_to_ptr.vmem [resolvable:$true] %s383
          %386 = dma.vmem_to_hbm [thread:$0]  %s384, 256, %s381, %s369
        $region40: #{tpu_custom_call.1} parent=31 // pred_fallthru
          _
      $region32: #{tpu_custom_call.1} parent=5 // pred_fallthru
        _
      %p387 = scmp.le.s32.totalorder 2, %s15
      // Predicated region
      $region41: #{tpu_custom_call.1} parent=5 // pred_check
        %p388 = pneg %p387
      $region42: #{tpu_custom_call.1} parent=5 // pred_check_branch
        %390 = sbr.rel (%p388) target = $region44
      $region43: #{tpu_custom_call.1} parent=5 // pred_region
        %s391 = ssub.s32 %s15, 2
        // Predicated region
        $region45: #{tpu_custom_call.1} parent=43 // pred_check
          %p392 = pneg %p112
        $region46: #{tpu_custom_call.1} parent=43 // pred_check_branch
          %394 = sbr.rel (%p392) target = $region48
        $region47: #{tpu_custom_call.1} parent=43 // pred_region
          %s395 = sand.u32 %s97, 1
          %s396 = scalar_lea.sflag [#allocation4], %s395
          %s397 = sand.u32 %s97, 1
          %s398 = smul.addr %s397, 16
          %s399 = scalar_lea.vmem [#allocation5], %s398
          %400 = dma.done %s396, 256
        $region48: #{tpu_custom_call.1} parent=43 // pred_fallthru
          _
      $region44: #{tpu_custom_call.1} parent=5 // pred_fallthru
        _
    $region6: #{tpu_custom_call.1} parent=1 // loop_footer
      %s19 = sadd.s32 1, %s15
    $region7: #{tpu_custom_call.1} parent=1 // loop_footer_branch
      %14 = sbr.rel target = $region3
    $region8: #{tpu_custom_call.1} parent=1 // loop_exit
      _
    %401 = vsyncpa [#allocation3], 1
    %s402 = scalar_lea.sflag [#allocation3], 1
    %403 = vsyncpa %s402, 1
    %404 = vsyncpa [#allocation4], 1
    %s405 = scalar_lea.sflag [#allocation4], 1
    %406 = vsyncpa %s405, 1

</llo_original>
